<compile_context>
chip_gen: v7x
topology: tpu7x:2x2x1
jax: 0.10.0
libtpu: 0.0.40
codegen_flags: <defaults>
</compile_context>

<pallas_src>
import functools

import jax
import jax.numpy as jnp
from jax import lax
from jax.experimental import pallas as pl
from jax.experimental.pallas import tpu as pltpu


def _p1c2_kernel(xt_ref, wmat_ref, o_ref, *, k):
    # xt_ref  : (4, N, Hp, Wp*Cin)      -- the four 2x2 max-pool taps, (W,C) on lanes
    # wmat_ref: (k*Wp*Cin, Cpad)        -- block-Toeplitz (over W tap) im2col weights,
    #                                      columns zero-padded to a multiple of 128
    # o_ref   : (N*Hp, Cpad)            -- out[(n,i), (co,j)] (+ zero padding columns)
    _, n, hp, wc = xt_ref.shape
    pad = (k - 1) // 2

    # ---- max-pool 2x2 stride 2: elementwise max over the 4 window taps ----
    pooled = jnp.max(xt_ref[...], axis=0)                        # (N, Hp, Wp*Cin)

    # ---- zero-pad along H only (W 'same' padding lives in wmat's zeros) ----
    zrow = jnp.zeros((n, pad, wc), pooled.dtype)
    padded = jnp.concatenate([zrow, pooled, zrow], axis=1)       # (N, Hp+2p, Wp*Cin)

    # ---- im2col over the H tap: k shifted slabs, concatenated on lanes ----
    patches = jnp.concatenate(
        [padded[:, ki:ki + hp, :].reshape(n * hp, wc) for ki in range(k)],
        axis=1,
    )                                                            # (N*Hp, k*Wp*Cin)

    # ---- single MXU matmul with f32 accumulation; full-lane unmasked store ----
    acc = jnp.dot(patches, wmat_ref[...], preferred_element_type=jnp.float32)
    o_ref[...] = acc.astype(o_ref.dtype)                         # (N*Hp, Cpad)


@jax.jit
def p1c2_forward(x_nchw, w_oihw):
    """x: (N, Cin, H, W) f32; w: (Cout, Cin, K, K) f32 -> (N, Cout, H//2, W//2)."""
    N, Cin, H, W = x_nchw.shape
    Cout, _, K, _ = w_oihw.shape
    assert H % 2 == 0 and W % 2 == 0, "MaxPool2d(2,2) path assumes even H, W"
    assert K % 2 == 1, "padding='same' mapping assumes an odd kernel"
    Hp, Wp = H // 2, W // 2
    pad = (K - 1) // 2

    # ---- glue (layout only): stack the four pooling taps, (W,C) merged on lanes
    x_nhwc = jnp.transpose(x_nchw, (0, 2, 3, 1))                          # (N,H,W,Cin)
    taps = jnp.stack(
        [x_nhwc[:, di::2, dj::2, :] for di in (0, 1) for dj in (0, 1)], axis=0
    )                                                                     # (4,N,Hp,Wp,Cin)
    x_taps = taps.reshape(4, N, Hp, Wp * Cin)

    # ---- glue (layout only): block-Toeplitz im2col weight matrix
    # wmat[ki*Wp*Cin + jq*Cin + ci, co*Wp + j] = w[co, ci, ki, jq - j + pad]
    # (zero where jq - j + pad is outside [0, K): implicit 'same' W padding)
    jq = jnp.arange(Wp)
    jo = jnp.arange(Wp)
    kj = jq[:, None] - jo[None, :] + pad                                  # (Wp, Wp)
    valid = (kj >= 0) & (kj < K)
    kj_c = jnp.clip(kj, 0, K - 1)
    w_t = jnp.transpose(w_oihw, (2, 3, 1, 0))                             # (ki,kj,ci,co)
    wm = jnp.where(valid[None, :, :, None, None], w_t[:, kj_c], 0.0)      # (ki,jq,j,ci,co)
    wm = jnp.transpose(wm, (0, 1, 3, 4, 2))                               # (ki,jq,ci,co,j)
    wmat = wm.reshape(K * Wp * Cin, Cout * Wp).astype(x_nchw.dtype)       # (224, 64)

    # ---- pad output columns to a multiple of 128 lanes (unmasked vst in kernel)
    cols = Cout * Wp
    cols_pad = ((cols + 127) // 128) * 128                                # 64 -> 128
    wmat_p = jnp.pad(wmat, ((0, 0), (0, cols_pad - cols)))                # (224, 128)

    out2d = pl.pallas_call(
        functools.partial(_p1c2_kernel, k=K),
        out_shape=jax.ShapeDtypeStruct((N * Hp, cols_pad), x_nchw.dtype),
        grid_spec=pltpu.PrefetchScalarGridSpec(
            num_scalar_prefetch=0,
            grid=(1,),
            in_specs=[
                pl.BlockSpec((4, N, Hp, Wp * Cin), lambda i: (0, 0, 0, 0)),
                pl.BlockSpec((K * Wp * Cin, cols_pad), lambda i: (0, 0)),
            ],
            out_specs=pl.BlockSpec((N * Hp, cols_pad), lambda i: (0, 0)),
        ),
        compiler_params=pltpu.CompilerParams(
            dimension_semantics=("arbitrary",),
        ),
    )(x_taps, wmat_p)

    # (N*Hp, Cpad) -> drop pad cols -> (N, Hp, Cout, Wp) -> (N, Cout, Hp, Wp)
    out = out2d[:, :cols].reshape(N, Hp, Cout, Wp)
    return jnp.transpose(out, (0, 2, 1, 3))


def _reference(x_nchw, w_oihw):
    # Pure-JAX reference: MaxPool2d(2,2) then Conv2d(k=7, padding='same', no bias).
    p1 = lax.reduce_window(
        x_nchw, -jnp.inf, lax.max,
        window_dimensions=(1, 1, 2, 2), window_strides=(1, 1, 2, 2),
        padding="VALID",
    )
    return lax.conv_general_dilated(
        p1, w_oihw, window_strides=(1, 1), padding="SAME",
        dimension_numbers=("NCHW", "OIHW", "NCHW"),
    )


if __name__ == "__main__":
    # Small shapes consistent with the module: batch=2, in_c=4, out_c=8, spatial=16.
    N, in_c, out_c, H, W = 2, 4, 8, 16, 16
    key = jax.random.PRNGKey(0)
    kx, kw = jax.random.split(key)

    x = jax.random.normal(kx, (N, in_c, H, W), dtype=jnp.float32)
    w = jax.random.normal(kw, (out_c, in_c, 7, 7), dtype=jnp.float32) / jnp.sqrt(
        in_c * 7.0 * 7.0
    )

    out = jax.block_until_ready(p1c2_forward(x, w))
    ref = _reference(x, w)

    assert out.shape == (N, out_c, H // 2, W // 2), out.shape
    assert jnp.allclose(out, ref, rtol=5e-2, atol=5e-2), float(
        jnp.max(jnp.abs(out - ref))
    )

    print("KERNEL_OK")
</pallas_src>

<mosaic_0001>
module attributes {stable_mosaic.version = 11 : i64} {
  func.func @_p1c2_kernel(%arg0: i32, %arg1: memref<4x2x8x32xf32, #tpu.memory_space<vmem>>, %arg2: memref<224x128xf32, #tpu.memory_space<vmem>>, %arg3: memref<16x128xf32, #tpu.memory_space<vmem>>) attributes {dimension_semantics = [#tpu.dimension_semantics<arbitrary>], iteration_bounds = array<i64: 1>, scalar_prefetch = 0 : i64, scratch_operands = 0 : i64, tpu.core_type = #tpu.core_type<tc>, window_params = [{pipeline_mode = #tpu.pipeline_mode<synchronous>, transform_indices = @transform_0, window_bounds = array<i64: 4, 2, 8, 32>}, {pipeline_mode = #tpu.pipeline_mode<synchronous>, transform_indices = @transform_1, window_bounds = array<i64: 224, 128>}, {pipeline_mode = #tpu.pipeline_mode<synchronous>, transform_indices = @transform_2, window_bounds = array<i64: 16, 128>}]} {
    %c0 = arith.constant 0 : index
    %c0_0 = arith.constant 0 : index
    %c0_1 = arith.constant 0 : index
    %c0_2 = arith.constant 0 : index
    %0 = vector.load %arg1[%c0, %c0_0, %c0_1, %c0_2] : memref<4x2x8x32xf32, #tpu.memory_space<vmem>>, vector<4x2x8x32xf32>
    %cst = arith.constant dense<0xFF800000> : vector<2x8x32xf32>
    %1 = vector.multi_reduction <maximumf>, %0, %cst [0] : vector<4x2x8x32xf32> to vector<2x8x32xf32>
    %cst_3 = arith.constant 0.000000e+00 : f32
    %2 = vector.broadcast %cst_3 : f32 to vector<2x3x32xf32>
    %3 = tpu.concatenate %2, %1, %2 in 1 : vector<2x3x32xf32>, vector<2x8x32xf32>, vector<2x3x32xf32> -> vector<2x14x32xf32>
    %4 = vector.extract_strided_slice %3 {offsets = [0, 0, 0], sizes = [2, 8, 32], strides = [1, 1, 1]} : vector<2x14x32xf32> to vector<2x8x32xf32>
    %5 = vector.shape_cast %4 : vector<2x8x32xf32> to vector<16x32xf32>
    %6 = vector.extract_strided_slice %3 {offsets = [0, 1, 0], sizes = [2, 8, 32], strides = [1, 1, 1]} : vector<2x14x32xf32> to vector<2x8x32xf32>
    %7 = vector.shape_cast %6 : vector<2x8x32xf32> to vector<16x32xf32>
    %8 = vector.extract_strided_slice %3 {offsets = [0, 2, 0], sizes = [2, 8, 32], strides = [1, 1, 1]} : vector<2x14x32xf32> to vector<2x8x32xf32>
    %9 = vector.shape_cast %8 : vector<2x8x32xf32> to vector<16x32xf32>
    %10 = vector.extract_strided_slice %3 {offsets = [0, 3, 0], sizes = [2, 8, 32], strides = [1, 1, 1]} : vector<2x14x32xf32> to vector<2x8x32xf32>
    %11 = vector.shape_cast %10 : vector<2x8x32xf32> to vector<16x32xf32>
    %12 = vector.extract_strided_slice %3 {offsets = [0, 4, 0], sizes = [2, 8, 32], strides = [1, 1, 1]} : vector<2x14x32xf32> to vector<2x8x32xf32>
    %13 = vector.shape_cast %12 : vector<2x8x32xf32> to vector<16x32xf32>
    %14 = vector.extract_strided_slice %3 {offsets = [0, 5, 0], sizes = [2, 8, 32], strides = [1, 1, 1]} : vector<2x14x32xf32> to vector<2x8x32xf32>
    %15 = vector.shape_cast %14 : vector<2x8x32xf32> to vector<16x32xf32>
    %16 = vector.extract_strided_slice %3 {offsets = [0, 6, 0], sizes = [2, 8, 32], strides = [1, 1, 1]} : vector<2x14x32xf32> to vector<2x8x32xf32>
    %17 = vector.shape_cast %16 : vector<2x8x32xf32> to vector<16x32xf32>
    %18 = tpu.concatenate %5, %7, %9, %11, %13, %15, %17 in 1 : vector<16x32xf32>, vector<16x32xf32>, vector<16x32xf32>, vector<16x32xf32>, vector<16x32xf32>, vector<16x32xf32>, vector<16x32xf32> -> vector<16x224xf32>
    %c0_4 = arith.constant 0 : index
    %c0_5 = arith.constant 0 : index
    %19 = vector.load %arg2[%c0_4, %c0_5] : memref<224x128xf32, #tpu.memory_space<vmem>>, vector<224x128xf32>
    %cst_6 = arith.constant dense<0.000000e+00> : vector<16x128xf32>
    %20 = tpu.matmul %18, %19, %cst_6 {dimension_numbers = #tpu.dot_dimension_numbers<[1], [0], [0], [1], [0, 0, 1, 1], [], []>} : vector<16x224xf32>, vector<224x128xf32>, vector<16x128xf32> -> vector<16x128xf32>
    %c0_7 = arith.constant 0 : index
    %c0_8 = arith.constant 0 : index
    %21 = vector.load %arg3[%c0_7, %c0_8] : memref<16x128xf32, #tpu.memory_space<vmem>>, vector<16x128xf32>
    tpu.vector_store %arg3[%c0_7, %c0_8], %20 {strides = array<i32>} : memref<16x128xf32, #tpu.memory_space<vmem>>, vector<16x128xf32>,
    return
  }
  func.func @transform_0(%arg0: i32) -> (i32, i32, i32, i32) {
    %c0_i32 = arith.constant 0 : i32
    %c0_i32_0 = arith.constant 0 : i32
    %c0_i32_1 = arith.constant 0 : i32
    %c0_i32_2 = arith.constant 0 : i32
    %c0_i32_3 = arith.constant 0 : i32
    return %c0_i32, %c0_i32_0, %c0_i32_1, %c0_i32_2 : i32, i32, i32, i32
  }
  func.func @transform_1(%arg0: i32) -> (i32, i32) {
    %c0_i32 = arith.constant 0 : i32
    %c0_i32_0 = arith.constant 0 : i32
    %c0_i32_1 = arith.constant 0 : i32
    return %c0_i32, %c0_i32_0 : i32, i32
  }
  func.func @transform_2(%arg0: i32) -> (i32, i32) {
    %c0_i32 = arith.constant 0 : i32
    %c0_i32_0 = arith.constant 0 : i32
    %c0_i32_1 = arith.constant 0 : i32
    return %c0_i32, %c0_i32_0 : i32, i32
  }
}

</mosaic_0001>

<llo_original>
// kernel: p1c2_forward.1
$region0: #{p1c2_forward.1}
  #allocation0 [shape = 'u32[]', space=smem, size = 0x4, offset = 0x4, fixed_abs, tag = 'smem constant byte address 0x4 - core index']
  #allocation1 [shape = 'u32[144,128]{1,0:T(1,128)}', space=vmem, size = 0x12000, scoped, tag = 'internal scratch']
  %s0 = inlined_call_operand.vmem [shape: f32[4,2,8,32], index: 0, kind: input, shape index: {}]
  %s1 = inlined_call_operand.vmem [shape: f32[224,128], index: 1, kind: input, shape index: {}]
  %s2 = inlined_call_operand.vmem [shape: f32[16,128], index: 2, kind: output, shape index: {}]
  %s3 = sld [smem:[#allocation0]]
  $region18: #{p1c2_forward.1} parent=0
    _
  %s5 = ssub.s32 1, %s3
  %s6 = scalar_select 0, %s5, %s3
  // Predicated region
  $region2: #{p1c2_forward.1} parent=0 // pred_check
    _
  $region3: #{p1c2_forward.1} parent=0 // pred_check_branch
    %8 = sbr.rel (0) target = $region5
  $region4: #{p1c2_forward.1} parent=0 // pred_region
    _
  $region5: #{p1c2_forward.1} parent=0 // pred_fallthru
    _
  // Predicated region
  $region6: #{p1c2_forward.1} parent=0 // pred_check
    _
  $region7: #{p1c2_forward.1} parent=0 // pred_check_branch
    %10 = sbr.rel (0) target = $region9
  $region8: #{p1c2_forward.1} parent=0 // pred_region
    _
  $region9: #{p1c2_forward.1} parent=0 // pred_fallthru
    _
  %v11 = vld [vmem:[%s0] sm:$0xff]
  %v12 = vld [vmem:[%s0 + $0x8] sm:$0xff]
  %v13 = vld [vmem:[%s0 + $0x10] sm:$0xff]
  %v14 = vld [vmem:[%s0 + $0x18] sm:$0xff]
  %v15 = vld [vmem:[%s0 + $0x20] sm:$0xff]
  %v16 = vld [vmem:[%s0 + $0x28] sm:$0xff]
  %v17 = vld [vmem:[%s0 + $0x30] sm:$0xff]
  %v18 = vld [vmem:[%s0 + $0x38] sm:$0xff]
  %vm19 = vcmask 261120
  %v20 = vsel %vm19, %v11, -inf
  %v21 = vsel %vm19, %v13, -inf
  %v22 = vsel %vm19, %v15, -inf
  %v23 = vmax.f32 %v20, %v22
  %v24 = vsel %vm19, %v17, -inf
  %v25 = vmax.f32 %v21, %v24
  %v26 = vmax.f32 %v23, %v25
  %v27 = vsel %vm19, %v12, -inf
  %v28 = vsel %vm19, %v14, -inf
  %v29 = vsel %vm19, %v16, -inf
  %v30 = vmax.f32 %v27, %v29
  %v31 = vsel %vm19, %v18, -inf
  %v32 = vmax.f32 %v28, %v31
  %v33 = vmax.f32 %v30, %v32
  %v36 = vrot.slane %v26, 5
  %v37 = vrot.slane %v33, 5
  %vm40 = vcmask 1042432
  %v41 = vsel %vm40, 0.0, %v36
  %v42 = vsel %vm40, 0.0, %v37
  %v43 = vsel %vm40, %v36, 0.0
  %v44 = vsel %vm40, %v37, 0.0
  %vm49 = vcmask 1046528
  %v50 = vrot.slane %v41, 1
  %v51 = vrot.slane %v43, 1
  %v52 = vsel %vm49, %v50, %v51
  %v53 = vrot.slane %v42, 1
  %v54 = vrot.slane %v44, 1
  %v55 = vsel %vm49, %v53, %v54
  %vm56 = vcmask 1045504
  %v57 = vrot.slane %v41, 2
  %v58 = vrot.slane %v43, 2
  %v59 = vsel %vm56, %v57, %v58
  %v60 = vrot.slane %v42, 2
  %v61 = vrot.slane %v44, 2
  %v62 = vsel %vm56, %v60, %v61
  %vm63 = vcmask 1044480
  %v64 = vrot.slane %v41, 3
  %v65 = vrot.slane %v43, 3
  %v66 = vsel %vm63, %v64, %v65
  %v67 = vrot.slane %v42, 3
  %v68 = vrot.slane %v44, 3
  %v69 = vsel %vm63, %v67, %v68
  %vm70 = vcmask 1043456
  %v71 = vrot.slane %v41, 4
  %v72 = vrot.slane %v43, 4
  %v73 = vsel %vm70, %v71, %v72
  %v74 = vrot.slane %v42, 4
  %v75 = vrot.slane %v44, 4
  %v76 = vsel %vm70, %v74, %v75
  %v79 = vrot.slane %v41, 5
  %v80 = vrot.slane %v43, 5
  %v81 = vsel %vm40, %v79, %v80
  %v82 = vrot.slane %v42, 5
  %v83 = vrot.slane %v44, 5
  %v84 = vsel %vm40, %v82, %v83
  %vm85 = vcmask 1041408
  %v86 = vrot.slane %v41, 6
  %v87 = vrot.slane %v43, 6
  %v88 = vsel %vm85, %v86, %v87
  %v89 = vrot.slane %v42, 6
  %v90 = vrot.slane %v44, 6
  %v91 = vsel %vm85, %v89, %v90
  %92 = vrot.lane.b32.xlu0 %v52, 32
  %v93 = vpop.permute.xlu0 %92
  %94 = vrot.lane.b32.xlu0 %v55, 32
  %v95 = vpop.permute.xlu0 %94
  %98 = vrot.lane.b32.xlu0 %v59, 64
  %v99 = vpop.permute.xlu0 %98
  %100 = vrot.lane.b32.xlu0 %v62, 64
  %v101 = vpop.permute.xlu0 %100
  %104 = vrot.lane.b32.xlu0 %v66, 96
  %v105 = vpop.permute.xlu0 %104
  %106 = vrot.lane.b32.xlu0 %v69, 96
  %v107 = vpop.permute.xlu0 %106
  %110 = vrot.lane.b32.xlu0 %v81, 32
  %v111 = vpop.permute.xlu0 %110
  %112 = vrot.lane.b32.xlu0 %v84, 32
  %v113 = vpop.permute.xlu0 %112
  %116 = vrot.lane.b32.xlu0 %v88, 64
  %v117 = vpop.permute.xlu0 %116
  %118 = vrot.lane.b32.xlu0 %v91, 64
  %v119 = vpop.permute.xlu0 %118
  %v122 = vsel %vm19, %v41, %v93
  %v123 = vsel %vm19, %v42, %v95
  %vm124 = vcmask 523264
  %v125 = vsel %vm124, %v122, %v99
  %v126 = vsel %vm124, %v123, %v101
  %vm127 = vcmask 785408
  %v128 = vsel %vm127, %v125, %v105
  %v129 = vsel %vm127, %v126, %v107
  %v130 = vsel %vm19, %v73, %v111
  %v131 = vsel %vm19, %v76, %v113
  %v132 = vsel %vm124, %v130, %v117
  %v133 = vsel %vm124, %v131, %v119
  %v134 = vld [vmem:[%s1] sm:$0xff]
  %v135 = vld [vmem:[%s1 + $0x8] sm:$0xff]
  %v136 = vld [vmem:[%s1 + $0x10] sm:$0xff]
  %v137 = vld [vmem:[%s1 + $0x18] sm:$0xff]
  %v138 = vld [vmem:[%s1 + $0x20] sm:$0xff]
  %v139 = vld [vmem:[%s1 + $0x28] sm:$0xff]
  %v140 = vld [vmem:[%s1 + $0x30] sm:$0xff]
  %v141 = vld [vmem:[%s1 + $0x38] sm:$0xff]
  %v142 = vld [vmem:[%s1 + $0x40] sm:$0xff]
  %v143 = vld [vmem:[%s1 + $0x48] sm:$0xff]
  %v144 = vld [vmem:[%s1 + $0x50] sm:$0xff]
  %v145 = vld [vmem:[%s1 + $0x58] sm:$0xff]
  %v146 = vld [vmem:[%s1 + $0x60] sm:$0xff]
  %v147 = vld [vmem:[%s1 + $0x68] sm:$0xff]
  %v148 = vld [vmem:[%s1 + $0x70] sm:$0xff]
  %v149 = vld [vmem:[%s1 + $0x78] sm:$0xff]
  %v150 = vld [vmem:[%s1 + $0x80] sm:$0xff]
  %v151 = vld [vmem:[%s1 + $0x88] sm:$0xff]
  %v152 = vld [vmem:[%s1 + $0x90] sm:$0xff]
  %v153 = vld [vmem:[%s1 + $0x98] sm:$0xff]
  %v154 = vld [vmem:[%s1 + $0xa0] sm:$0xff]
  %v155 = vld [vmem:[%s1 + $0xa8] sm:$0xff]
  %v156 = vld [vmem:[%s1 + $0xb0] sm:$0xff]
  %v157 = vld [vmem:[%s1 + $0xb8] sm:$0xff]
  %v158 = vld [vmem:[%s1 + $0xc0] sm:$0xff]
  %v159 = vld [vmem:[%s1 + $0xc8] sm:$0xff]
  %v160 = vld [vmem:[%s1 + $0xd0] sm:$0xff]
  %v161 = vld [vmem:[%s1 + $0xd8] sm:$0xff]
  %v163 = vsel %vm127, %v132, 0
  %v166 = vsel %vm127, %v133, 0
  %168 = vmatprep.subr.mxu0 0.0
  %169 = vmatpush1.msra.mxu0 %v134
  %170 = vmatprep.subr.mxu0 0.0
  %171 = vmatpush1.msra.mxu0 %v135
  %172 = vmatprep.subr.mxu0 0.0
  %173 = vmatpush1.msra.mxu0 %v136
  %174 = vmatprep.subr.mxu0 0.0
  %175 = vmatpush1.msra.mxu0 %v137
  %176 = vmatprep.subr.mxu0 0.0
  %177 = vmatpush1.msra.mxu0 %v138
  %178 = vmatprep.subr.mxu0 0.0
  %179 = vmatpush1.msra.mxu0 %v139
  %180 = vmatprep.subr.mxu0 0.0
  %181 = vmatpush1.msra.mxu0 %v140
  %182 = vmatprep.subr.mxu0 0.0
  %183 = vmatpush1.msra.mxu0 %v141
  %184 = vmatprep.subr.mxu0 0.0
  %185 = vmatpush1.msra.mxu0 %v142
  %186 = vmatprep.subr.mxu0 0.0
  %187 = vmatpush1.msra.mxu0 %v143
  %188 = vmatprep.subr.mxu0 0.0
  %189 = vmatpush1.msra.mxu0 %v144
  %190 = vmatprep.subr.mxu0 0.0
  %191 = vmatpush1.msra.mxu0 %v145
  %192 = vmatprep.subr.mxu0 0.0
  %193 = vmatpush1.msra.mxu0 %v146
  %194 = vmatprep.subr.mxu0 0.0
  %195 = vmatpush1.msra.mxu0 %v147
  %196 = vmatprep.subr.mxu0 0.0
  %197 = vmatpush1.msra.mxu0 %v148
  %198 = vmatprep.subr.mxu0 0.0
  %199 = vmatpush1.msra.mxu0 %v149
  %200 = vmatprep.subr.mxu0 0.0
  %201 = vmatpush1.msra.mxu0 %v150
  %202 = vmatprep.subr.mxu0 0.0
  %203 = vmatpush1.msra.mxu0 %v151
  %204 = vmatprep.subr.mxu0 0.0
  %205 = vmatpush1.msra.mxu0 %v152
  %206 = vmatprep.subr.mxu0 0.0
  %207 = vmatpush1.msra.mxu0 %v153
  %208 = vmatprep.subr.mxu0 0.0
  %209 = vmatpush1.msra.mxu0 %v154
  %210 = vmatprep.subr.mxu0 0.0
  %211 = vmatpush1.msra.mxu0 %v155
  %212 = vmatprep.subr.mxu0 0.0
  %213 = vmatpush1.msra.mxu0 %v156
  %214 = vmatprep.subr.mxu0 0.0
  %215 = vmatpush1.msra.mxu0 %v157
  %216 = vmatprep.subr.mxu0 0.0
  %217 = vmatpush1.msra.mxu0 %v158
  %218 = vmatprep.subr.mxu0 0.0
  %219 = vmatpush1.msra.mxu0 %v159
  %220 = vmatprep.subr.mxu0 0.0
  %221 = vmatpush1.msra.mxu0 %v160
  %222 = vmatprep.subr.mxu0 0.0
  %223 = vmatpush1.msra.mxu0 %v161
  %224 = vmatprep.subr.mxu0 0.0
  %225 = vmatpush1.msra.mxu0 0.0
  %226 = vmatprep.subr.mxu0 0.0
  %227 = vmatpush1.msra.mxu0 0.0
  %228 = vmatprep.subr.mxu0 0.0
  %229 = vmatpush1.msra.mxu0 0.0
  %230 = vmatprep.subr.mxu0 0.0
  %231 = vmatpush1.msra.mxu0 0.0
  %232 = vmatprep.mubr.f32.mxu0 %v163
  %233 = vmatmul.mubr.f32.gmra.mrb[0].mxu0 %v128
  %v234 = vpop.f32.mrb[0].mxu0
  %v235 = vadd.f32 0.0, %v234
  %v236 = vpop.f32.mrb[0].mxu0
  %237 = vmatprep.mubr.f32.mxu0 %v166
  %238 = vmatmul.mubr.f32.gmra.mrb[0].mxu0 %v129
  %v239 = vpop.f32.mrb[0].mxu0
  %v240 = vadd.f32 0.0, %v239
  %v241 = vpop.f32.mrb[0].mxu0
  %242 = vdwg.mxu0
  %243 = vst [vmem:[%s2] sm:$0xff] %v235
  %244 = vst [vmem:[%s2 + $0x8] sm:$0xff] %v240
  // Predicated region
  $region10: #{p1c2_forward.1} parent=0 // pred_check
    _
  $region11: #{p1c2_forward.1} parent=0 // pred_check_branch
    %246 = sbr.rel (0) target = $region13
  $region12: #{p1c2_forward.1} parent=0 // pred_region
    _
  $region13: #{p1c2_forward.1} parent=0 // pred_fallthru
    _
  // Predicated region
  $region14: #{p1c2_forward.1} parent=0 // pred_check
    _
  $region15: #{p1c2_forward.1} parent=0 // pred_check_branch
    %248 = sbr.rel (0) target = $region17
  $region16: #{p1c2_forward.1} parent=0 // pred_region
    _
  $region17: #{p1c2_forward.1} parent=0 // pred_fallthru
    _

</llo_original>
